<compile_context>
chip_gen: v7x
topology: tpu7x:2x2x1
jax: 0.10.0
libtpu: 0.0.40
codegen_flags: <defaults>
</compile_context>

<pallas_src>
import jax
import jax.numpy as jnp
from jax.experimental import pallas as pl
from jax.experimental.pallas import tpu as pltpu


def _round_up(x, m):
    return ((x + m - 1) // m) * m


def pack_critic_params(w1, b1, w2, b2, w3, b3):
    """Pack all Critic parameters into one zero-padded (R, C) f32 buffer.

    Row layout (offsets are multiples of 8; C = 128-rounded max(l1, l2)):
      [o_w1 : o_w1+obs)    w1       (obs x l1)  stored in [:obs, :l1]
      [o_w2s: o_w2s+C)     w2[:l1]  (l1  x l2)  stored in [:l1,  :l2]  (x h1)
      [o_w2a: o_w2a+act)   w2[l1:]  (act x l2)  stored in [:act, :l2]  (x action)
      [o_w3]               w3^T     (1 x l2)    single row
      [o_b1], [o_b2], [o_b3]  bias rows (8-row strides)
    Padded lanes/rows are zero, so relu keeps padded lanes of h1/h2 exactly 0.
    """
    obs, l1 = w1.shape
    l1a, l2 = w2.shape
    act = l1a - l1
    assert act >= 1, "w2 must have l1 + action_space input rows"
    assert w3.shape == (l2, 1)

    C = _round_up(max(l1, l2, 1), 128)
    obs_p = _round_up(obs, 8)
    act_p = _round_up(act, 8)

    o_w1 = 0
    o_w2s = o_w1 + obs_p
    o_w2a = o_w2s + C
    o_w3 = o_w2a + act_p          # single row (w3 transposed); 8-row stride
    o_b1 = o_w3 + 8
    o_b2 = o_b1 + 8
    o_b3 = o_b2 + 8
    R = o_b3 + 8

    f32 = jnp.float32
    packed = jnp.zeros((R, C), f32)
    packed = packed.at[o_w1:o_w1 + obs, :l1].set(w1.astype(f32))
    packed = packed.at[o_w2s:o_w2s + l1, :l2].set(w2[:l1].astype(f32))
    packed = packed.at[o_w2a:o_w2a + act, :l2].set(w2[l1:].astype(f32))
    packed = packed.at[o_w3, :l2].set(w3[:, 0].astype(f32))
    packed = packed.at[o_b1, :l1].set(b1.astype(f32))
    packed = packed.at[o_b2, :l2].set(b2.astype(f32))
    packed = packed.at[o_b3, :1].set(b3.astype(f32))

    dims = dict(obs=obs, act=act, l1=l1, l2=l2, C=C, R=R,
                o_w1=o_w1, o_w2s=o_w2s, o_w2a=o_w2a, o_w3=o_w3,
                o_b1=o_b1, o_b2=o_b2, o_b3=o_b3)
    return packed, dims


def _make_critic_kernel(d):
    obs, act, C = d["obs"], d["act"], d["C"]
    o_w1, o_w2s, o_w2a, o_w3 = d["o_w1"], d["o_w2s"], d["o_w2a"], d["o_w3"]
    o_b1, o_b2, o_b3 = d["o_b1"], d["o_b2"], d["o_b3"]

    def kernel(s_ref, a_ref, p_ref, o_ref):
        # fc1 + relu.  Padded lanes (>= l1) of w1/b1 are zero -> padded lanes of
        # h1 are exactly 0 after the relu.
        w1 = p_ref[o_w1:o_w1 + obs, :]
        b1 = p_ref[o_b1:o_b1 + 1, :]
        h1 = jnp.maximum(
            jnp.dot(s_ref[...], w1, preferred_element_type=jnp.float32) + b1,
            0.0)

        # fc2 on concat([h1, action]) == exact split matmul, then relu.
        w2s = p_ref[o_w2s:o_w2s + C, :]
        w2a = p_ref[o_w2a:o_w2a + act, :]
        b2 = p_ref[o_b2:o_b2 + 1, :]
        h2 = jnp.maximum(
            jnp.dot(h1, w2s, preferred_element_type=jnp.float32)
            + jnp.dot(a_ref[...], w2a, preferred_element_type=jnp.float32)
            + b2,
            0.0)

        # fc3: w3 is packed transposed as one row, so the (l2 -> 1) projection
        # is a VPU multiply + lane reduction; the store is a narrow (TB, 1)
        # block (4 B/row of HBM output instead of a 128-lane slab).
        w3r = p_ref[o_w3:o_w3 + 1, :]        # (1, C), zeros beyond l2
        b3 = p_ref[o_b3:o_b3 + 1, 0:1]       # (1, 1)
        o_ref[...] = jnp.sum(h2 * w3r, axis=-1, keepdims=True) + b3

    return kernel


def _choose_batch_tile(B, block_batch):
    """Small B -> one tile; large B -> >=2 tiles, each a multiple of 256."""
    B8 = _round_up(B, 8)
    if B8 <= 512:
        return B8                               # grid=(1,): too small to split
    half = _round_up(-(-B8 // 2), 256)          # >= 2 tiles for v7x's two TCs
    return max(256, min(_round_up(block_batch, 256), half))


def critic_forward(state, action, packed, dims, *, block_batch=1024):
    """state: (B, obs), action: (B, act), packed from pack_critic_params -> (B, 1)."""
    B, obs = state.shape
    act = action.shape[1]
    assert obs == dims["obs"] and act == dims["act"] and action.shape[0] == B
    R, C = dims["R"], dims["C"]

    TB = _choose_batch_tile(B, block_batch)
    n_tiles = pl.cdiv(B, TB)   # ragged tail rows are masked out by Pallas

    return pl.pallas_call(
        _make_critic_kernel(dims),
        out_shape=jax.ShapeDtypeStruct((B, 1), jnp.float32),
        grid=(n_tiles,),
        in_specs=[
            # Block last dims equal the full feature dims -> no input padding,
            # no host-side copies; batch axis streams in TB-row tiles.
            pl.BlockSpec((TB, obs), lambda i: (i, 0)),
            pl.BlockSpec((TB, act), lambda i: (i, 0)),
            # Constant block index: packed params are DMA'd HBM->VMEM once and
            # stay resident across all batch tiles.
            pl.BlockSpec((R, C), lambda i: (0, 0)),
        ],
        out_specs=pl.BlockSpec((TB, 1), lambda i: (i, 0)),
        compiler_params=pltpu.CompilerParams(
            dimension_semantics=("parallel",)),  # megacore sharding on v7x
    )(state.astype(jnp.float32), action.astype(jnp.float32), packed)


def init_critic_params(key, obs_space, action_space, l1_size, l2_size):
    """Deterministic init mimicking nn.Linear's default U(-1/sqrt(fan_in), ...)."""
    def linear(key, fan_in, fan_out):
        kw, kb = jax.random.split(key)
        bound = float(fan_in) ** -0.5
        w = jax.random.uniform(kw, (fan_in, fan_out), jnp.float32, -bound, bound)
        b = jax.random.uniform(kb, (fan_out,), jnp.float32, -bound, bound)
        return w, b

    k1, k2, k3 = jax.random.split(key, 3)
    w1, b1 = linear(k1, obs_space, l1_size)
    w2, b2 = linear(k2, l1_size + action_space, l2_size)
    w3, b3 = linear(k3, l2_size, 1)
    return {"w1": w1, "b1": b1, "w2": w2, "b2": b2, "w3": w3, "b3": b3}


if __name__ == "__main__":
    # Small shapes consistent with the module's forward.
    B, OBS, ACT = 16, 32, 8
    L1, L2 = 64, 48

    key = jax.random.PRNGKey(0)
    k_params, k_state, k_action = jax.random.split(key, 3)

    params = init_critic_params(k_params, OBS, ACT, L1, L2)
    state = jax.random.normal(k_state, (B, OBS), jnp.float32)
    action = jax.random.normal(k_action, (B, ACT), jnp.float32)

    # Pack the parameters once; this single buffer is the only param DMA.
    packed, dims = pack_critic_params(params["w1"], params["b1"],
                                      params["w2"], params["b2"],
                                      params["w3"], params["b3"])
    packed = jax.block_until_ready(packed)

    # Small batch -> single (B, obs)/(B, act) tile, grid=(1,), (B, 1) output.
    out = critic_forward(state, action, packed, dims)
    out = jax.block_until_ready(out)

    # Pure-JAX reference check (same math as the PyTorch forward).
    h1 = jax.nn.relu(state @ params["w1"] + params["b1"])
    h2 = jax.nn.relu(jnp.concatenate([h1, action], axis=1) @ params["w2"]
                     + params["b2"])
    ref = h2 @ params["w3"] + params["b3"]

    assert out.shape == (B, 1)
    assert jnp.allclose(out, ref, atol=1e-4, rtol=1e-4)
    print("KERNEL_OK")
</pallas_src>

<mosaic_0001>
module attributes {stable_mosaic.version = 11 : i64} {
  func.func @kernel(%arg0: i32, %arg1: memref<16x32xf32, #tpu.memory_space<vmem>>, %arg2: memref<16x8xf32, #tpu.memory_space<vmem>>, %arg3: memref<200x128xf32, #tpu.memory_space<vmem>>, %arg4: memref<16x1xf32, #tpu.memory_space<vmem>>) attributes {dimension_semantics = [#tpu.dimension_semantics<parallel>], iteration_bounds = array<i64: 1>, scalar_prefetch = 0 : i64, scratch_operands = 0 : i64, tpu.core_type = #tpu.core_type<tc>, window_params = [{transform_indices = @transform_0, window_bounds = array<i64: 16, 32>}, {transform_indices = @transform_1, window_bounds = array<i64: 16, 8>}, {pipeline_mode = #tpu.pipeline_mode<synchronous>, transform_indices = @transform_2, window_bounds = array<i64: 200, 128>}, {transform_indices = @transform_3, window_bounds = array<i64: 16, 1>}]} {
    %c0 = arith.constant 0 : index
    %c0_0 = arith.constant 0 : index
    %0 = vector.load %arg3[%c0, %c0_0] : memref<200x128xf32, #tpu.memory_space<vmem>>, vector<32x128xf32>
    %c176 = arith.constant 176 : index
    %c0_1 = arith.constant 0 : index
    %1 = vector.load %arg3[%c176, %c0_1] : memref<200x128xf32, #tpu.memory_space<vmem>>, vector<1x128xf32>
    %c0_2 = arith.constant 0 : index
    %c0_3 = arith.constant 0 : index
    %2 = vector.load %arg1[%c0_2, %c0_3] : memref<16x32xf32, #tpu.memory_space<vmem>>, vector<16x32xf32>
    %cst = arith.constant dense<0.000000e+00> : vector<16x128xf32>
    %3 = tpu.matmul %2, %0, %cst {dimension_numbers = #tpu.dot_dimension_numbers<[1], [0], [0], [1], [0, 0, 1, 1], [], []>} : vector<16x32xf32>, vector<32x128xf32>, vector<16x128xf32> -> vector<16x128xf32>
    %4 = vector.broadcast %1 : vector<1x128xf32> to vector<16x128xf32>
    %5 = arith.addf %3, %4 : vector<16x128xf32>
    %cst_4 = arith.constant 0.000000e+00 : f32
    %6 = vector.broadcast %cst_4 : f32 to vector<16x128xf32>
    %7 = arith.maximumf %5, %6 : vector<16x128xf32>
    %c32 = arith.constant 32 : index
    %c0_5 = arith.constant 0 : index
    %8 = vector.load %arg3[%c32, %c0_5] : memref<200x128xf32, #tpu.memory_space<vmem>>, vector<128x128xf32>
    %c160 = arith.constant 160 : index
    %c0_6 = arith.constant 0 : index
    %9 = vector.load %arg3[%c160, %c0_6] : memref<200x128xf32, #tpu.memory_space<vmem>>, vector<8x128xf32>
    %c184 = arith.constant 184 : index
    %c0_7 = arith.constant 0 : index
    %10 = vector.load %arg3[%c184, %c0_7] : memref<200x128xf32, #tpu.memory_space<vmem>>, vector<1x128xf32>
    %cst_8 = arith.constant dense<0.000000e+00> : vector<16x128xf32>
    %11 = tpu.matmul %7, %8, %cst_8 {dimension_numbers = #tpu.dot_dimension_numbers<[1], [0], [0], [1], [0, 0, 1, 1], [], []>} : vector<16x128xf32>, vector<128x128xf32>, vector<16x128xf32> -> vector<16x128xf32>
    %c0_9 = arith.constant 0 : index
    %c0_10 = arith.constant 0 : index
    %12 = vector.load %arg2[%c0_9, %c0_10] : memref<16x8xf32, #tpu.memory_space<vmem>>, vector<16x8xf32>
    %cst_11 = arith.constant dense<0.000000e+00> : vector<16x128xf32>
    %13 = tpu.matmul %12, %9, %cst_11 {dimension_numbers = #tpu.dot_dimension_numbers<[1], [0], [0], [1], [0, 0, 1, 1], [], []>} : vector<16x8xf32>, vector<8x128xf32>, vector<16x128xf32> -> vector<16x128xf32>
    %14 = arith.addf %11, %13 : vector<16x128xf32>
    %15 = vector.broadcast %10 : vector<1x128xf32> to vector<16x128xf32>
    %16 = arith.addf %14, %15 : vector<16x128xf32>
    %cst_12 = arith.constant 0.000000e+00 : f32
    %17 = vector.broadcast %cst_12 : f32 to vector<16x128xf32>
    %18 = arith.maximumf %16, %17 : vector<16x128xf32>
    %c168 = arith.constant 168 : index
    %c0_13 = arith.constant 0 : index
    %19 = vector.load %arg3[%c168, %c0_13] : memref<200x128xf32, #tpu.memory_space<vmem>>, vector<1x128xf32>
    %c192 = arith.constant 192 : index
    %c0_14 = arith.constant 0 : index
    %20 = vector.load %arg3[%c192, %c0_14] : memref<200x128xf32, #tpu.memory_space<vmem>>, vector<1x1xf32>
    %21 = vector.broadcast %19 : vector<1x128xf32> to vector<16x128xf32>
    %22 = arith.mulf %18, %21 : vector<16x128xf32>
    %cst_15 = arith.constant dense<0.000000e+00> : vector<16xf32>
    %23 = vector.multi_reduction <add>, %22, %cst_15 [1] : vector<16x128xf32> to vector<16xf32>
    %24 = vector.shape_cast %23 : vector<16xf32> to vector<16x1xf32>
    %25 = vector.broadcast %20 : vector<1x1xf32> to vector<16x1xf32>
    %26 = arith.addf %24, %25 : vector<16x1xf32>
    %c0_16 = arith.constant 0 : index
    %c0_17 = arith.constant 0 : index
    %27 = vector.load %arg4[%c0_16, %c0_17] : memref<16x1xf32, #tpu.memory_space<vmem>>, vector<16x1xf32>
    tpu.vector_store %arg4[%c0_16, %c0_17], %26 {strides = array<i32>} : memref<16x1xf32, #tpu.memory_space<vmem>>, vector<16x1xf32>,
    return
  }
  func.func @transform_0(%arg0: i32) -> (i32, i32) {
    %c0_i32 = arith.constant 0 : i32
    %c0_i32_0 = arith.constant 0 : i32
    return %arg0, %c0_i32 : i32, i32
  }
  func.func @transform_1(%arg0: i32) -> (i32, i32) {
    %c0_i32 = arith.constant 0 : i32
    %c0_i32_0 = arith.constant 0 : i32
    return %arg0, %c0_i32 : i32, i32
  }
  func.func @transform_2(%arg0: i32) -> (i32, i32) {
    %c0_i32 = arith.constant 0 : i32
    %c0_i32_0 = arith.constant 0 : i32
    %c0_i32_1 = arith.constant 0 : i32
    return %c0_i32, %c0_i32_0 : i32, i32
  }
  func.func @transform_3(%arg0: i32) -> (i32, i32) {
    %c0_i32 = arith.constant 0 : i32
    %c0_i32_0 = arith.constant 0 : i32
    return %arg0, %c0_i32 : i32, i32
  }
}

</mosaic_0001>

<llo_original>
// kernel: tpu_custom_call.1
$region0: #{tpu_custom_call.1}
  #allocation0 [shape = 'u32[]', space=smem, size = 0x4, offset = 0x4, fixed_abs, tag = 'smem constant byte address 0x4 - core index']
  #allocation1 [shape = 'u32[144,128]{1,0:T(1,128)}', space=vmem, size = 0x12000, scoped, tag = 'internal scratch']
  %s0 = inlined_call_operand.vmem [shape: f32[16,32], index: 0, kind: input, shape index: {}]
  %s1 = inlined_call_operand.vmem [shape: f32[16,8], index: 1, kind: input, shape index: {}]
  %s2 = inlined_call_operand.hbm [shape: f32[200,128], index: 2, kind: input, shape index: {}]
  %s3 = inlined_call_operand.vmem [shape: f32[16,1], index: 3, kind: output, shape index: {}]
  %s4 = sld [smem:[#allocation0]]
  $region26: #{tpu_custom_call.1} parent=0
    _
  %s6 = ssub.s32 1, %s4
  %s7 = scalar_select 0, %s6, %s4
  $region1: #{tpu_custom_call.1} parent=0
    #allocation2 [shape = 'u8[102400]{0}', space=vmem, size = 0x19000, scoped, tag = 'input window, operand 2, single buffered']
    #allocation3 [shape = 's32[1]{0}', space=sflag, size = 0x4, scoped, tag = 'scoped memory for tpu_custom_call.1']
    %8 = vsyncpa [#allocation3], 0
    // Predicated region
    $region2: #{tpu_custom_call.1} parent=1 // pred_check
      _
    $region3: #{tpu_custom_call.1} parent=1 // pred_check_branch
      %10 = sbr.rel (0) target = $region5
    $region4: #{tpu_custom_call.1} parent=1 // pred_region
      _
    $region5: #{tpu_custom_call.1} parent=1 // pred_fallthru
      _
    // Predicated region
    $region6: #{tpu_custom_call.1} parent=1 // pred_check
      _
    $region7: #{tpu_custom_call.1} parent=1 // pred_check_branch
      %12 = sbr.rel (0) target = $region9
    $region8: #{tpu_custom_call.1} parent=1 // pred_region
      _
    $region9: #{tpu_custom_call.1} parent=1 // pred_fallthru
      _
    // Predicated region
    $region10: #{tpu_custom_call.1} parent=1 // pred_check
      _
    $region11: #{tpu_custom_call.1} parent=1 // pred_check_branch
      %14 = sbr.rel (0) target = $region13
    $region12: #{tpu_custom_call.1} parent=1 // pred_region
      %s16 = ssub.s32 3200, 3200
      %17 = vsyncadd [#allocation3], %s16
      %s18 = sshll.u32 [#allocation2], 4
      %s19 = int_to_ptr.vmem [resolvable:$true] %s18
      %24 = dma.hbm_to_vmem [thread:$0]  %s2, 3200, %s19, [#allocation3], 128, 128, 8
    $region13: #{tpu_custom_call.1} parent=1 // pred_fallthru
      _
    // Predicated region
    $region14: #{tpu_custom_call.1} parent=1 // pred_check
      _
    $region15: #{tpu_custom_call.1} parent=1 // pred_check_branch
      %26 = sbr.rel (0) target = $region17
    $region16: #{tpu_custom_call.1} parent=1 // pred_region
      %27 = dma.done [#allocation3], 3200
    $region17: #{tpu_custom_call.1} parent=1 // pred_fallthru
      _
    %v28 = vld [vmem:[#allocation2] sm:$0xff]
    %v29 = vld [vmem:[#allocation2 + $0x8] sm:$0xff]
    %v30 = vld [vmem:[#allocation2 + $0x10] sm:$0xff]
    %v31 = vld [vmem:[#allocation2 + $0x18] sm:$0xff]
    %v32 = vld [vmem:[#allocation2 + $0xb0] sm:$0x1]
    %v33 = vld [vmem:[%s0] sm:$0xff]
    %v34 = vld [vmem:[%s0 + $0x8] sm:$0xff]
    %v35 = vlaneseq
    %v36 = vshrl.u32 %v35, 7
    %v37 = vsub.s32 0, %v36
    %v38 = vrot.slane %v32, %v37
    %vm39 = vcmask 261120
    %v41 = vsel %vm39, %v33, 0
    %v44 = vsel %vm39, %v34, 0
    %46 = vmatprep.subr.mxu0 0.0
    %47 = vmatpush1.msra.mxu0 %v28
    %48 = vmatprep.subr.mxu0 0.0
    %49 = vmatpush1.msra.mxu0 %v29
    %50 = vmatprep.subr.mxu0 0.0
    %51 = vmatpush1.msra.mxu0 %v30
    %52 = vmatprep.subr.mxu0 0.0
    %53 = vmatpush1.msra.mxu0 %v31
    %54 = vmatprep.subr.mxu0 0.0
    %55 = vmatpush1.msra.mxu0 0.0
    %56 = vmatprep.subr.mxu0 0.0
    %57 = vmatpush1.msra.mxu0 0.0
    %58 = vmatprep.subr.mxu0 0.0
    %59 = vmatpush1.msra.mxu0 0.0
    %60 = vmatprep.subr.mxu0 0.0
    %61 = vmatpush1.msra.mxu0 0.0
    %62 = vmatprep.subr.mxu0 0.0
    %63 = vmatpush1.msra.mxu0 0.0
    %64 = vmatprep.subr.mxu0 0.0
    %65 = vmatpush1.msra.mxu0 0.0
    %66 = vmatprep.subr.mxu0 0.0
    %67 = vmatpush1.msra.mxu0 0.0
    %68 = vmatprep.subr.mxu0 0.0
    %69 = vmatpush1.msra.mxu0 0.0
    %70 = vmatprep.subr.mxu0 0.0
    %71 = vmatpush1.msra.mxu0 0.0
    %72 = vmatprep.subr.mxu0 0.0
    %73 = vmatpush1.msra.mxu0 0.0
    %74 = vmatprep.subr.mxu0 0.0
    %75 = vmatpush1.msra.mxu0 0.0
    %76 = vmatprep.subr.mxu0 0.0
    %77 = vmatpush1.msra.mxu0 0.0
    %78 = vmatprep.subr.mxu0 0.0
    %79 = vmatpush1.msra.mxu0 0.0
    %80 = vmatprep.subr.mxu0 0.0
    %81 = vmatpush1.msra.mxu0 0.0
    %82 = vmatprep.subr.mxu0 0.0
    %83 = vmatpush1.msra.mxu0 0.0
    %84 = vmatprep.subr.mxu0 0.0
    %85 = vmatpush1.msra.mxu0 0.0
    %86 = vmatprep.subr.mxu0 0.0
    %87 = vmatpush1.msra.mxu0 0.0
    %88 = vmatprep.subr.mxu0 0.0
    %89 = vmatpush1.msra.mxu0 0.0
    %90 = vmatprep.subr.mxu0 0.0
    %91 = vmatpush1.msra.mxu0 0.0
    %92 = vmatprep.subr.mxu0 0.0
    %93 = vmatpush1.msra.mxu0 0.0
    %94 = vmatprep.subr.mxu0 0.0
    %95 = vmatpush1.msra.mxu0 0.0
    %96 = vmatprep.subr.mxu0 0.0
    %97 = vmatpush1.msra.mxu0 0.0
    %98 = vmatprep.subr.mxu0 0.0
    %99 = vmatpush1.msra.mxu0 0.0
    %100 = vmatprep.subr.mxu0 0.0
    %101 = vmatpush1.msra.mxu0 0.0
    %102 = vmatprep.subr.mxu0 0.0
    %103 = vmatpush1.msra.mxu0 0.0
    %104 = vmatprep.subr.mxu0 0.0
    %105 = vmatpush1.msra.mxu0 0.0
    %106 = vmatprep.subr.mxu0 0.0
    %107 = vmatpush1.msra.mxu0 0.0
    %108 = vmatprep.subr.mxu0 0.0
    %109 = vmatpush1.msra.mxu0 0.0
    %110 = vmatprep.mubr.f32.mxu0 0.0
    %111 = vmatmul.mubr.f32.gmra.mrb[0].mxu0 %v41
    %v112 = vpop.f32.mrb[0].mxu0
    %v113 = vadd.f32 %v38, %v112
    %v114 = vpop.f32.mrb[0].mxu0
    %115 = vmatprep.mubr.f32.mxu0 0.0
    %116 = vmatmul.mubr.f32.gmra.mrb[0].mxu0 %v44
    %v117 = vpop.f32.mrb[0].mxu0
    %v118 = vadd.f32 %v38, %v117
    %v119 = vpop.f32.mrb[0].mxu0
    %120 = vdwg.mxu0
    %v121 = vmax.f32 %v113, 0.0
    %v122 = vmax.f32 %v118, 0.0
    %v123 = vld [vmem:[#allocation2 + $0x20] sm:$0xff]
    %v124 = vld [vmem:[#allocation2 + $0x28] sm:$0xff]
    %v125 = vld [vmem:[#allocation2 + $0x30] sm:$0xff]
    %v126 = vld [vmem:[#allocation2 + $0x38] sm:$0xff]
    %v127 = vld [vmem:[#allocation2 + $0x40] sm:$0xff]
    %v128 = vld [vmem:[#allocation2 + $0x48] sm:$0xff]
    %v129 = vld [vmem:[#allocation2 + $0x50] sm:$0xff]
    %v130 = vld [vmem:[#allocation2 + $0x58] sm:$0xff]
    %v131 = vld [vmem:[#allocation2 + $0x60] sm:$0xff]
    %v132 = vld [vmem:[#allocation2 + $0x68] sm:$0xff]
    %v133 = vld [vmem:[#allocation2 + $0x70] sm:$0xff]
    %v134 = vld [vmem:[#allocation2 + $0x78] sm:$0xff]
    %v135 = vld [vmem:[#allocation2 + $0x80] sm:$0xff]
    %v136 = vld [vmem:[#allocation2 + $0x88] sm:$0xff]
    %v137 = vld [vmem:[#allocation2 + $0x90] sm:$0xff]
    %v138 = vld [vmem:[#allocation2 + $0x98] sm:$0xff]
    %v139 = vld [vmem:[#allocation2 + $0xa0] sm:$0xff]
    %v140 = vld [vmem:[#allocation2 + $0xb8] sm:$0x1]
    %v141 = vld [vmem:[%s1] sm:$0xff]
    %v142 = vld [vmem:[%s1 + $0x8] sm:$0xff]
    %vm143 = vcmask 64512
    %v145 = vsel %vm143, %v141, 0
    %v148 = vsel %vm143, %v142, 0
    %150 = vmatprep.subr.mxu0 0.0
    %151 = vmatpush1.msra.mxu0 %v139
    %152 = vmatprep.subr.mxu0 0.0
    %153 = vmatpush1.msra.mxu0 0.0
    %154 = vmatprep.subr.mxu0 0.0
    %155 = vmatpush1.msra.mxu0 0.0
    %156 = vmatprep.subr.mxu0 0.0
    %157 = vmatpush1.msra.mxu0 0.0
    %158 = vmatprep.subr.mxu0 0.0
    %159 = vmatpush1.msra.mxu0 0.0
    %160 = vmatprep.subr.mxu0 0.0
    %161 = vmatpush1.msra.mxu0 0.0
    %162 = vmatprep.subr.mxu0 0.0
    %163 = vmatpush1.msra.mxu0 0.0
    %164 = vmatprep.subr.mxu0 0.0
    %165 = vmatpush1.msra.mxu0 0.0
    %166 = vmatprep.subr.mxu0 0.0
    %167 = vmatpush1.msra.mxu0 0.0
    %168 = vmatprep.subr.mxu0 0.0
    %169 = vmatpush1.msra.mxu0 0.0
    %170 = vmatprep.subr.mxu0 0.0
    %171 = vmatpush1.msra.mxu0 0.0
    %172 = vmatprep.subr.mxu0 0.0
    %173 = vmatpush1.msra.mxu0 0.0
    %174 = vmatprep.subr.mxu0 0.0
    %175 = vmatpush1.msra.mxu0 0.0
    %176 = vmatprep.subr.mxu0 0.0
    %177 = vmatpush1.msra.mxu0 0.0
    %178 = vmatprep.subr.mxu0 0.0
    %179 = vmatpush1.msra.mxu0 0.0
    %180 = vmatprep.subr.mxu0 0.0
    %181 = vmatpush1.msra.mxu0 0.0
    %182 = vmatprep.subr.mxu0 0.0
    %183 = vmatpush1.msra.mxu0 0.0
    %184 = vmatprep.subr.mxu0 0.0
    %185 = vmatpush1.msra.mxu0 0.0
    %186 = vmatprep.subr.mxu0 0.0
    %187 = vmatpush1.msra.mxu0 0.0
    %188 = vmatprep.subr.mxu0 0.0
    %189 = vmatpush1.msra.mxu0 0.0
    %190 = vmatprep.subr.mxu0 0.0
    %191 = vmatpush1.msra.mxu0 0.0
    %192 = vmatprep.subr.mxu0 0.0
    %193 = vmatpush1.msra.mxu0 0.0
    %194 = vmatprep.subr.mxu0 0.0
    %195 = vmatpush1.msra.mxu0 0.0
    %196 = vmatprep.subr.mxu0 0.0
    %197 = vmatpush1.msra.mxu0 0.0
    %198 = vmatprep.subr.mxu0 0.0
    %199 = vmatpush1.msra.mxu0 0.0
    %200 = vmatprep.subr.mxu0 0.0
    %201 = vmatpush1.msra.mxu0 0.0
    %202 = vmatprep.subr.mxu0 0.0
    %203 = vmatpush1.msra.mxu0 0.0
    %204 = vmatprep.subr.mxu0 0.0
    %205 = vmatpush1.msra.mxu0 0.0
    %206 = vmatprep.subr.mxu0 0.0
    %207 = vmatpush1.msra.mxu0 0.0
    %208 = vmatprep.subr.mxu0 0.0
    %209 = vmatpush1.msra.mxu0 0.0
    %210 = vmatprep.subr.mxu0 0.0
    %211 = vmatpush1.msra.mxu0 0.0
    %212 = vmatprep.subr.mxu0 0.0
    %213 = vmatpush1.msra.mxu0 0.0
    %214 = vmatprep.mubr.f32.mxu0 0.0
    %215 = vmatmul.mubr.f32.gmra.mrb[0].mxu0 %v145
    %v216 = vpop.f32.mrb[0].mxu0
    %v217 = vadd.f32 0.0, %v216
    %v218 = vpop.f32.mrb[0].mxu0
    %219 = vmatprep.mubr.f32.mxu0 0.0
    %220 = vmatmul.mubr.f32.gmra.mrb[0].mxu0 %v148
    %v221 = vpop.f32.mrb[0].mxu0
    %v222 = vadd.f32 0.0, %v221
    %v223 = vpop.f32.mrb[0].mxu0
    %224 = vdwg.mxu0
    %225 = vmatprep.subr.mxu0 0.0
    %226 = vmatpush1.msra.mxu0 %v123
    %227 = vmatprep.subr.mxu0 0.0
    %228 = vmatpush1.msra.mxu0 %v124
    %229 = vmatprep.subr.mxu0 0.0
    %230 = vmatpush1.msra.mxu0 %v125
    %231 = vmatprep.subr.mxu0 0.0
    %232 = vmatpush1.msra.mxu0 %v126
    %233 = vmatprep.subr.mxu0 0.0
    %234 = vmatpush1.msra.mxu0 %v127
    %235 = vmatprep.subr.mxu0 0.0
    %236 = vmatpush1.msra.mxu0 %v128
    %237 = vmatprep.subr.mxu0 0.0
    %238 = vmatpush1.msra.mxu0 %v129
    %239 = vmatprep.subr.mxu0 0.0
    %240 = vmatpush1.msra.mxu0 %v130
    %241 = vmatprep.subr.mxu0 0.0
    %242 = vmatpush1.msra.mxu0 %v131
    %243 = vmatprep.subr.mxu0 0.0
    %244 = vmatpush1.msra.mxu0 %v132
    %245 = vmatprep.subr.mxu0 0.0
    %246 = vmatpush1.msra.mxu0 %v133
    %247 = vmatprep.subr.mxu0 0.0
    %248 = vmatpush1.msra.mxu0 %v134
    %249 = vmatprep.subr.mxu0 0.0
    %250 = vmatpush1.msra.mxu0 %v135
    %251 = vmatprep.subr.mxu0 0.0
    %252 = vmatpush1.msra.mxu0 %v136
    %253 = vmatprep.subr.mxu0 0.0
    %254 = vmatpush1.msra.mxu0 %v137
    %255 = vmatprep.subr.mxu0 0.0
    %256 = vmatpush1.msra.mxu0 %v138
    %257 = vmatprep.subr.mxu0 0.0
    %258 = vmatpush1.msra.mxu0 0.0
    %259 = vmatprep.subr.mxu0 0.0
    %260 = vmatpush1.msra.mxu0 0.0
    %261 = vmatprep.subr.mxu0 0.0
    %262 = vmatpush1.msra.mxu0 0.0
    %263 = vmatprep.subr.mxu0 0.0
    %264 = vmatpush1.msra.mxu0 0.0
    %265 = vmatprep.subr.mxu0 0.0
    %266 = vmatpush1.msra.mxu0 0.0
    %267 = vmatprep.subr.mxu0 0.0
    %268 = vmatpush1.msra.mxu0 0.0
    %269 = vmatprep.subr.mxu0 0.0
    %270 = vmatpush1.msra.mxu0 0.0
    %271 = vmatprep.subr.mxu0 0.0
    %272 = vmatpush1.msra.mxu0 0.0
    %273 = vmatprep.subr.mxu0 0.0
    %274 = vmatpush1.msra.mxu0 0.0
    %275 = vmatprep.subr.mxu0 0.0
    %276 = vmatpush1.msra.mxu0 0.0
    %277 = vmatprep.subr.mxu0 0.0
    %278 = vmatpush1.msra.mxu0 0.0
    %279 = vmatprep.subr.mxu0 0.0
    %280 = vmatpush1.msra.mxu0 0.0
    %281 = vmatprep.subr.mxu0 0.0
    %282 = vmatpush1.msra.mxu0 0.0
    %283 = vmatprep.subr.mxu0 0.0
    %284 = vmatpush1.msra.mxu0 0.0
    %285 = vmatprep.subr.mxu0 0.0
    %286 = vmatpush1.msra.mxu0 0.0
    %287 = vmatprep.subr.mxu0 0.0
    %288 = vmatpush1.msra.mxu0 0.0
    %289 = vmatprep.mubr.f32.mxu0 0.0
    %290 = vmatmul.mubr.f32.gmra.mrb[0].mxu0 %v121
    %v291 = vpop.f32.mrb[0].mxu0
    %v292 = vadd.f32 %v217, %v291
    %v293 = vpop.f32.mrb[0].mxu0
    %294 = vmatprep.mubr.f32.mxu0 0.0
    %295 = vmatmul.mubr.f32.gmra.mrb[0].mxu0 %v122
    %v296 = vpop.f32.mrb[0].mxu0
    %v297 = vadd.f32 %v222, %v296
    %v298 = vpop.f32.mrb[0].mxu0
    %299 = vdwg.mxu0
    %v300 = vlaneseq
    %v301 = vshrl.u32 %v300, 7
    %v302 = vsub.s32 0, %v301
    %v303 = vrot.slane %v140, %v302
    %v304 = vadd.f32 %v292, %v303
    %v305 = vadd.f32 %v297, %v303
    %v306 = vmax.f32 %v304, 0.0
    %v307 = vmax.f32 %v305, 0.0
    %v308 = vld [vmem:[#allocation2 + $0xa8] sm:$0x1]
    %v309 = vld [vmem:[#allocation2 + $0xc0] sm:$0x1]
    %v310 = vlaneseq
    %v311 = vshrl.u32 %v310, 7
    %v312 = vsub.s32 0, %v311
    %v313 = vrot.slane %v308, %v312
    %v314 = vmul.f32 %v306, %v313
    %v315 = vmul.f32 %v307, %v313
    %316 = vadd.xlane.f32.xlu0 %v314
    %v317 = vpop.xlane.xlu0 %316
    %318 = vadd.xlane.f32.xlu0 %v315
    %v319 = vpop.xlane.xlu0 %318
    %v320 = vlaneseq
    %v321 = vshrl.u32 %v320, 7
    %v322 = vsub.s32 0, %v321
    %v323 = vrot.slane %v309, %v322
    %v324 = vadd.f32 %v317, %v323
    %v325 = vadd.f32 %v319, %v323
    %vm326 = vcmask 7168
    %327 = vst.msk [vmem:[%s3] sm:$0xff] %vm326, %v324
    %328 = vst.msk [vmem:[%s3 + $0x8] sm:$0xff] %vm326, %v325
    // Predicated region
    $region18: #{tpu_custom_call.1} parent=1 // pred_check
      _
    $region19: #{tpu_custom_call.1} parent=1 // pred_check_branch
      %330 = sbr.rel (0) target = $region21
    $region20: #{tpu_custom_call.1} parent=1 // pred_region
      _
    $region21: #{tpu_custom_call.1} parent=1 // pred_fallthru
      _
    // Predicated region
    $region22: #{tpu_custom_call.1} parent=1 // pred_check
      _
    $region23: #{tpu_custom_call.1} parent=1 // pred_check_branch
      %332 = sbr.rel (0) target = $region25
    $region24: #{tpu_custom_call.1} parent=1 // pred_region
      _
    $region25: #{tpu_custom_call.1} parent=1 // pred_fallthru
      _
    %333 = vsyncpa [#allocation3], 1

</llo_original>
